<compile_context>
chip_gen: v5e
topology: v5e:2x2
jax: 0.10.0
libtpu: 0.0.40
codegen_flags: <defaults>
</compile_context>

<pallas_src>
import functools

import jax
import jax.numpy as jnp
from jax.experimental import pallas as pl
from jax.experimental.pallas import tpu as pltpu


def _round_up(a: int, b: int) -> int:
    return (a + b - 1) // b * b


def _cdiv(a: int, b: int) -> int:
    return -(-a // b)


def _balanced_tile(dim: int, align: int, cap: int) -> int:
    """Tile size <= cap, multiple of `align`, sized to minimise edge waste."""
    cap = max(align, (cap // align) * align)
    n_tiles = _cdiv(dim, cap)
    tile = _round_up(_cdiv(dim, n_tiles), align)
    return min(tile, cap)


def _pool_rows_kernel(x_ref, o_ref, *, hw: int, tl: int, mask_tail: bool,
                      inv_count: float):
    """Per-row spatial mean via partial lane-reduces accumulated into o_ref.

    x_ref: (TR, TL) tile of the (R, HW) input            [VMEM]
    o_ref: (TR, 1)  resident per-row pooled-mean output   [VMEM]
    """
    k = pl.program_id(1)

    @pl.when(k == 0)
    def _init():
        o_ref[...] = jnp.zeros_like(o_ref)

    xt = x_ref[...]
    if xt.dtype != jnp.float32:            # cast only if input is not f32
        xt = xt.astype(jnp.float32)
    if mask_tail:                          # static: only when HW % TL != 0
        lane = jax.lax.broadcasted_iota(jnp.int32, xt.shape, 1)
        xt = jnp.where(lane < (hw - k * tl), xt, 0.0)

    # One cross-lane reduce per step (XLU, free slot), tiny VPU accumulate.
    o_ref[...] += jnp.sum(xt, axis=-1, keepdims=True)

    @pl.when(k == pl.num_programs(1) - 1)
    def _finalize():
        o_ref[...] *= inv_count


def domain_transform(x_nchw, weight, bias):
    """x_nchw: (N, C, H, W); weight: (C, 1); bias: (1,). Returns scalar f32."""
    N, C, H, W = x_nchw.shape
    R, HW = N * C, H * W

    # Lane-dense 2D view (free metadata change for contiguous NCHW).
    x2d = x_nchw.reshape(R, HW)
    itemsize = x2d.dtype.itemsize

    TR = _balanced_tile(R, 8, 512)
    TL = _balanced_tile(HW, 128, 4096)
    grid = (_cdiv(R, TR), _cdiv(HW, TL))
    mask_tail = (HW % TL) != 0

    # Double-buffered input block + (lane-padded) output block + margin.
    block_bytes = TR * TL * itemsize
    vmem_limit = 2 * block_bytes + 2 * TR * 128 * 4 + (4 << 20)
    vmem_limit = int(min(max(vmem_limit, 32 << 20), 48 << 20))

    kernel = functools.partial(
        _pool_rows_kernel, hw=HW, tl=TL, mask_tail=mask_tail,
        inv_count=1.0 / float(HW))

    pooled = pl.pallas_call(
        kernel,
        out_shape=jax.ShapeDtypeStruct((R, 1), jnp.float32),
        grid_spec=pltpu.PrefetchScalarGridSpec(
            num_scalar_prefetch=0,
            grid=grid,
            in_specs=[pl.BlockSpec((TR, TL), lambda r, k: (r, k))],
            out_specs=pl.BlockSpec((TR, 1), lambda r, k: (r, 0)),
        ),
        compiler_params=pltpu.CompilerParams(
            dimension_semantics=("parallel", "arbitrary"),
            vmem_limit_bytes=vmem_limit,
        ),
        cost_estimate=pl.CostEstimate(
            flops=R * HW,
            transcendentals=0,
            bytes_accessed=R * HW * itemsize + R * 4,
        ),
    )(x2d)

    # Tiny epilogue on (N, C): Linear(C, 1) + bias + ReLU + mean over batch.
    pooled = pooled.reshape(N, C)
    y = jnp.maximum(pooled @ weight + bias, 0.0)     # (N, 1)
    return jnp.mean(y)


if __name__ == "__main__":
    # Small shapes consistent with the module: batch=2, planes=4, 16x16 spatial.
    N, C, H, W = 2, 4, 16, 16

    key = jax.random.PRNGKey(0)
    kx, kw, kb = jax.random.split(key, 3)

    x = jax.random.normal(kx, (N, C, H, W), dtype=jnp.float32)

    # Deterministic Linear(planes, 1) params (PyTorch-default-style uniform init).
    bound = 1.0 / jnp.sqrt(C)
    weight = jax.random.uniform(kw, (C, 1), minval=-bound, maxval=bound,
                                dtype=jnp.float32)
    bias = jax.random.uniform(kb, (1,), minval=-bound, maxval=bound,
                              dtype=jnp.float32)

    fn = jax.jit(domain_transform)
    result = fn(x, weight, bias)
    jax.block_until_ready(result)

    # Pure-JAX reference check.
    ref = jnp.mean(
        jnp.maximum(jnp.mean(x, axis=(2, 3)) @ weight + bias[0], 0.0)
    )
    assert jnp.allclose(result, ref, atol=1e-5, rtol=1e-5), (result, ref)

    print("KERNEL_OK")
</pallas_src>

<mosaic_0001>
module attributes {stable_mosaic.version = 11 : i64} {
  func.func @_pool_rows_kernel(%arg0: i32, %arg1: i32, %arg2: memref<8x256xf32, #tpu.memory_space<vmem>>, %arg3: memref<8x1xf32, #tpu.memory_space<vmem>>) attributes {dimension_semantics = [#tpu.dimension_semantics<parallel>, #tpu.dimension_semantics<arbitrary>], iteration_bounds = array<i64: 1, 1>, scalar_prefetch = 0 : i64, scratch_operands = 0 : i64, tpu.core_type = #tpu.core_type<tc>, window_params = [{transform_indices = @transform_0, window_bounds = array<i64: 8, 256>}, {transform_indices = @transform_1, window_bounds = array<i64: 8, 1>}]} {
    %c0_i32 = arith.constant 0 : i32
    %0 = arith.cmpi eq, %arg1, %c0_i32 : i32
    %1 = arith.extui %0 : i1 to i32
    %c0_i32_0 = arith.constant 0 : i32
    %2 = arith.cmpi ne, %1, %c0_i32_0 : i32
    scf.if %2 {
      %cst_8 = arith.constant 0.000000e+00 : f32
      %12 = vector.broadcast %cst_8 : f32 to vector<8x1xf32>
      %c0_9 = arith.constant 0 : index
      %c0_10 = arith.constant 0 : index
      %13 = vector.load %arg3[%c0_9, %c0_10] : memref<8x1xf32, #tpu.memory_space<vmem>>, vector<8x1xf32>
      tpu.vector_store %arg3[%c0_9, %c0_10], %12 {strides = array<i32>} : memref<8x1xf32, #tpu.memory_space<vmem>>, vector<8x1xf32>,
    } else {
    }
    %c0 = arith.constant 0 : index
    %c0_1 = arith.constant 0 : index
    %3 = vector.load %arg2[%c0, %c0_1] : memref<8x256xf32, #tpu.memory_space<vmem>>, vector<8x256xf32>
    %c0_2 = arith.constant 0 : index
    %c0_3 = arith.constant 0 : index
    %4 = vector.load %arg3[%c0_2, %c0_3] : memref<8x1xf32, #tpu.memory_space<vmem>>, vector<8x1xf32>
    %cst = arith.constant dense<0.000000e+00> : vector<8xf32>
    %5 = vector.multi_reduction <add>, %3, %cst [1] : vector<8x256xf32> to vector<8xf32>
    %6 = vector.shape_cast %5 : vector<8xf32> to vector<8x1xf32>
    %7 = arith.addf %4, %6 : vector<8x1xf32>
    %c0_4 = arith.constant 0 : index
    %c0_5 = arith.constant 0 : index
    %8 = vector.load %arg3[%c0_4, %c0_5] : memref<8x1xf32, #tpu.memory_space<vmem>>, vector<8x1xf32>
    tpu.vector_store %arg3[%c0_4, %c0_5], %7 {strides = array<i32>} : memref<8x1xf32, #tpu.memory_space<vmem>>, vector<8x1xf32>,
    %c0_i32_6 = arith.constant 0 : i32
    %9 = arith.cmpi eq, %arg1, %c0_i32_6 : i32
    %10 = arith.extui %9 : i1 to i32
    %c0_i32_7 = arith.constant 0 : i32
    %11 = arith.cmpi ne, %10, %c0_i32_7 : i32
    scf.if %11 {
      %c0_8 = arith.constant 0 : index
      %c0_9 = arith.constant 0 : index
      %12 = vector.load %arg3[%c0_8, %c0_9] : memref<8x1xf32, #tpu.memory_space<vmem>>, vector<8x1xf32>
      %cst_10 = arith.constant 3.906250e-03 : f32
      %13 = vector.broadcast %cst_10 : f32 to vector<8x1xf32>
      %14 = arith.mulf %12, %13 : vector<8x1xf32>
      %c0_11 = arith.constant 0 : index
      %c0_12 = arith.constant 0 : index
      %15 = vector.load %arg3[%c0_11, %c0_12] : memref<8x1xf32, #tpu.memory_space<vmem>>, vector<8x1xf32>
      tpu.vector_store %arg3[%c0_11, %c0_12], %14 {strides = array<i32>} : memref<8x1xf32, #tpu.memory_space<vmem>>, vector<8x1xf32>,
    } else {
    }
    return
  }
  func.func @transform_0(%arg0: i32, %arg1: i32) -> (i32, i32) {
    %c0_i32 = arith.constant 0 : i32
    return %arg0, %arg1 : i32, i32
  }
  func.func @transform_1(%arg0: i32, %arg1: i32) -> (i32, i32) {
    %c0_i32 = arith.constant 0 : i32
    %c0_i32_0 = arith.constant 0 : i32
    return %arg0, %c0_i32 : i32, i32
  }
}

</mosaic_0001>

<llo_original>
// kernel: domain_transform.1
$region0: #{domain_transform.1}
  #allocation0 [shape = 'u32[]', space=smem, size = 0x4, offset = 0x4, fixed_abs, tag = 'smem constant byte address 0x4 - core index']
  #allocation1 [shape = 'u32[72,128]{1,0:T(1,128)}', space=vmem, size = 0x9000, scoped, tag = 'internal scratch']
  %s0 = inlined_call_operand.vmem [shape: f32[8,256], index: 0, kind: input, shape index: {}]
  %s1 = inlined_call_operand.vmem [shape: f32[8,1], index: 1, kind: output, shape index: {}]
  %s2 = sld [smem:[#allocation0]]
  $region22: #{domain_transform.1} parent=0
    _
  %s4 = ssub.s32 1, %s2
  %s5 = scalar_select 0, %s4, %s2
  // Predicated region
  $region2: #{domain_transform.1} parent=0 // pred_check
    _
  $region3: #{domain_transform.1} parent=0 // pred_check_branch
    %7 = sbr.rel (0) target = $region5
  $region4: #{domain_transform.1} parent=0 // pred_region
    _
  $region5: #{domain_transform.1} parent=0 // pred_fallthru
    _
  %p8 = scmp.eq.s32.totalorder 0, 0
  // Predicated region
  $region6: #{domain_transform.1} parent=0 // pred_check
    %p9 = pneg %p8
  $region7: #{domain_transform.1} parent=0 // pred_check_branch
    %11 = sbr.rel (%p9) target = $region9
  $region8: #{domain_transform.1} parent=0 // pred_region
    %vm12 = vcmask 7168
    %13 = vst.msk [vmem:[%s1] sm:$0xff] %vm12, 0.0
  $region9: #{domain_transform.1} parent=0 // pred_fallthru
    _
  %v14 = vld [vmem:[%s0] sm:$0xff]
  %v15 = vld [vmem:[%s0 + $0x8] sm:$0xff]
  %v16 = vld [vmem:[%s1] sm:$0xff]
  %v17 = vadd.f32 %v14, %v15
  %18 = vadd.xlane.f32.xlu0 %v17
  %v19 = vpop.xlane.xlu0 %18
  %v20 = vadd.f32 %v16, %v19
  %vm21 = vcmask 7168
  %22 = vst.msk [vmem:[%s1] sm:$0xff] %vm21, %v20
  // Predicated region
  $region10: #{domain_transform.1} parent=0 // pred_check
    %p23 = pneg %p8
  $region11: #{domain_transform.1} parent=0 // pred_check_branch
    %25 = sbr.rel (%p23) target = $region13
  $region12: #{domain_transform.1} parent=0 // pred_region
    %v26 = vld [vmem:[%s1] sm:$0xff]
    %v27 = vmul.f32 %v26, 0.00390625
    %28 = vst.msk [vmem:[%s1] sm:$0xff] %vm21, %v27
  $region13: #{domain_transform.1} parent=0 // pred_fallthru
    _
  // Predicated region
  $region14: #{domain_transform.1} parent=0 // pred_check
    _
  $region15: #{domain_transform.1} parent=0 // pred_check_branch
    %30 = sbr.rel (0) target = $region17
  $region16: #{domain_transform.1} parent=0 // pred_region
    _
  $region17: #{domain_transform.1} parent=0 // pred_fallthru
    _
  // Predicated region
  $region18: #{domain_transform.1} parent=0 // pred_check
    _
  $region19: #{domain_transform.1} parent=0 // pred_check_branch
    %32 = sbr.rel (0) target = $region21
  $region20: #{domain_transform.1} parent=0 // pred_region
    _
  $region21: #{domain_transform.1} parent=0 // pred_fallthru
    _

</llo_original>
